<compile_context>
chip_gen: v7x
topology: tpu7x:2x2x1
jax: 0.10.0
libtpu: 0.0.40
codegen_flags: <defaults>
</compile_context>

<pallas_src>
import functools
import math

import jax
import jax.numpy as jnp
import numpy as np
from jax.experimental import pallas as pl
from jax.experimental.pallas import tpu as pltpu


def _round_up(x: int, m: int) -> int:
    return (x + m - 1) // m * m


def _arcface_kernel(label_ref, cos_ref, out_ref, *, s: float, cos_m: float,
                    sin_m: float, tc: int):
    """One (tb, tc) tile of the ArcFace margin transform."""
    j = pl.program_id(1)                       # class-tile index along the grid
    cosine = cos_ref[...]                      # (tb, tc) f32 cosine logits
    label = label_ref[...]                     # (tb, 1)  i32 local class id, -1 => skip
    # Column id of each lane in *global* (shard-local) class coordinates.
    col = jax.lax.broadcasted_iota(jnp.int32, cosine.shape, 1) + j * tc
    hit = jnp.logical_and(label != -1, col == label)
    # cos(acos(x) + m) = x*cos(m) - sqrt(1 - x^2)*sin(m).  Clamp the sqrt argument so
    # fp rounding of normalized embeddings (|x| marginally above 1) stays finite.
    sin_t = jnp.sqrt(jnp.maximum(jnp.float32(1.0) - cosine * cosine, jnp.float32(0.0)))
    with_margin = cosine * jnp.float32(cos_m) - sin_t * jnp.float32(sin_m)
    out_ref[...] = jnp.where(hit, with_margin, cosine) * jnp.float32(s)


def arcface(cosine: jax.Array, label: jax.Array, *, s: float = 64.0, m: float = 0.5,
            tb: int = 512, tc: int = 512) -> jax.Array:
    """ArcFace margin.  cosine: [B, C] float32 logits; label: [B] int (-1 == no margin,
    i.e. the sample's class does not live on this partial-FC shard)."""
    B, C = cosine.shape
    cosine = cosine.astype(jnp.float32)
    label = label.astype(jnp.int32)

    # Clamp tile sizes to the (alignment-rounded) problem; keep (8, 128) alignment so
    # stores stay lane-dense (unmasked vst) and VMEM use stays ~1 MiB/tile (fits the
    # 16 MiB scoped default on v5e and v7x's 64 MiB physical VMEM with double buffering).
    tb = min(tb, _round_up(B, 8))
    tc = min(tc, _round_up(C, 128))
    Bp, Cp = _round_up(B, tb), _round_up(C, tc)

    cos_p = cosine if (Bp, Cp) == (B, C) else jnp.pad(cosine, ((0, Bp - B), (0, Cp - C)))
    lab_p = label if Bp == B else jnp.pad(label, (0, Bp - B), constant_values=-1)
    lab2d = lab_p.reshape(Bp, 1)

    kernel = functools.partial(_arcface_kernel, s=float(s),
                               cos_m=math.cos(m), sin_m=math.sin(m), tc=tc)
    out = pl.pallas_call(
        kernel,
        out_shape=jax.ShapeDtypeStruct((Bp, Cp), jnp.float32),
        grid=(Bp // tb, Cp // tc),
        in_specs=[
            pl.BlockSpec((tb, 1), lambda i, j: (i, 0)),    # label column, reused over j
            pl.BlockSpec((tb, tc), lambda i, j: (i, j)),   # cosine tile (lane-dense)
        ],
        out_specs=pl.BlockSpec((tb, tc), lambda i, j: (i, j)),
        compiler_params=pltpu.CompilerParams(
            dimension_semantics=("parallel", "parallel")),  # both TCs on v7x
    )(lab2d, cos_p)

    if (Bp, Cp) != (B, C):
        out = out[:B, :C]
    return out


def arcface_ref(cosine, label, s=64.0, m=0.5):
    """Pure-JAX reference matching the PyTorch forward (acos / add-m / cos / scale)."""
    B, C = cosine.shape
    valid = label != -1
    one_hot = (jnp.arange(C)[None, :] == label[:, None]) & valid[:, None]
    theta = jnp.arccos(cosine) + jnp.where(one_hot, m, 0.0)
    return jnp.cos(theta) * s


# TODO(synk): torch.distributed all_gather / all_reduce / reduce_scatter, the optimizer
# state swapping, checkpoint IO, and the partial sampling (sample_rate < 1) are
# host/collective control flow with no single-shard Pallas equivalent.

if __name__ == "__main__":
    key = jax.random.PRNGKey(0)
    k1, k2, k3, k4 = jax.random.split(key, 4)

    # --- check 1: aligned shapes, explicit small tiles -> exercises the 2-D grid and
    #     the class-tile iota offset.
    B, C = 16, 384
    cosine = jax.random.uniform(k1, (B, C), jnp.float32, minval=-0.99, maxval=0.99)
    label = jax.random.randint(k2, (B,), 0, C, dtype=jnp.int32)
    label = label.at[1].set(-1).at[5].set(-1)      # rows whose class is on another shard
    out = jax.block_until_ready(arcface(cosine, label, tb=8, tc=128))
    np.testing.assert_allclose(np.asarray(out), np.asarray(arcface_ref(cosine, label)),
                               rtol=1e-5, atol=2e-4)

    # --- check 2: unaligned shapes -> exercises the padding path + default tiles.
    B2, C2 = 10, 200
    cosine2 = jax.random.uniform(k3, (B2, C2), jnp.float32, minval=-0.99, maxval=0.99)
    label2 = jax.random.randint(k4, (B2,), 0, C2, dtype=jnp.int32)
    label2 = label2.at[0].set(-1)
    out2 = jax.block_until_ready(arcface(cosine2, label2))
    np.testing.assert_allclose(np.asarray(out2), np.asarray(arcface_ref(cosine2, label2)),
                               rtol=1e-5, atol=2e-4)

    # --- check 3: full single-shard DistPartialFC forward path:
    #     logits = total_features @ normalize(W).T (XLA/MXU), then the margin kernel.
    E = 32
    feats = jax.random.normal(k3, (B, E), jnp.float32)
    weight = jax.random.normal(k4, (C, E), jnp.float32) * 0.01
    fn = feats / jnp.linalg.norm(feats, axis=1, keepdims=True)
    wn = weight / jnp.linalg.norm(weight, axis=1, keepdims=True)
    logits = jnp.clip(fn @ wn.T, -1.0, 1.0)
    out3 = jax.block_until_ready(arcface(logits, label, tb=8, tc=128))
    np.testing.assert_allclose(np.asarray(out3), np.asarray(arcface_ref(logits, label)),
                               rtol=1e-5, atol=2e-4)

    print("KERNEL_OK")
</pallas_src>

<mosaic_0001>
module attributes {stable_mosaic.version = 11 : i64} {
  func.func @_arcface_kernel(%arg0: i32, %arg1: i32, %arg2: memref<8x1xi32, #tpu.memory_space<vmem>>, %arg3: memref<8x128xf32, #tpu.memory_space<vmem>>, %arg4: memref<8x128xf32, #tpu.memory_space<vmem>>) attributes {dimension_semantics = [#tpu.dimension_semantics<parallel>, #tpu.dimension_semantics<parallel>], iteration_bounds = array<i64: 2, 3>, scalar_prefetch = 0 : i64, scratch_operands = 0 : i64, tpu.core_type = #tpu.core_type<tc>, window_params = [{transform_indices = @transform_0, window_bounds = array<i64: 8, 1>}, {transform_indices = @transform_1, window_bounds = array<i64: 8, 128>}, {transform_indices = @transform_2, window_bounds = array<i64: 8, 128>}]} {
    %c0 = arith.constant 0 : index
    %c0_0 = arith.constant 0 : index
    %0 = vector.load %arg3[%c0, %c0_0] : memref<8x128xf32, #tpu.memory_space<vmem>>, vector<8x128xf32>
    %c0_1 = arith.constant 0 : index
    %c0_2 = arith.constant 0 : index
    %1 = vector.load %arg2[%c0_1, %c0_2] : memref<8x1xi32, #tpu.memory_space<vmem>>, vector<8x1xi32>
    %2 = tpu.iota {dimensions = array<i32: 1>} : vector<8x128xi32>
    %c128_i32 = arith.constant 128 : i32
    %3 = arith.muli %arg1, %c128_i32 : i32
    %4 = vector.broadcast %3 : i32 to vector<8x128xi32>
    %5 = arith.addi %2, %4 : vector<8x128xi32>
    %c-1_i32 = arith.constant -1 : i32
    %6 = vector.broadcast %c-1_i32 : i32 to vector<8x1xi32>
    %7 = arith.cmpi ne, %1, %6 : vector<8x1xi32>
    %8 = vector.broadcast %1 : vector<8x1xi32> to vector<8x128xi32>
    %9 = arith.cmpi eq, %5, %8 : vector<8x128xi32>
    %10 = vector.broadcast %7 : vector<8x1xi1> to vector<8x128xi1>
    %11 = arith.andi %10, %9 : vector<8x128xi1>
    %12 = arith.mulf %0, %0 : vector<8x128xf32>
    %cst = arith.constant 1.000000e+00 : f32
    %13 = vector.broadcast %cst : f32 to vector<8x128xf32>
    %14 = arith.subf %13, %12 : vector<8x128xf32>
    %cst_3 = arith.constant 0.000000e+00 : f32
    %15 = vector.broadcast %cst_3 : f32 to vector<8x128xf32>
    %16 = arith.maximumf %14, %15 : vector<8x128xf32>
    %17 = math.sqrt %16 : vector<8x128xf32>
    %cst_4 = arith.constant 0.87758255 : f32
    %18 = vector.broadcast %cst_4 : f32 to vector<8x128xf32>
    %19 = arith.mulf %0, %18 : vector<8x128xf32>
    %cst_5 = arith.constant 0.47942555 : f32
    %20 = vector.broadcast %cst_5 : f32 to vector<8x128xf32>
    %21 = arith.mulf %17, %20 : vector<8x128xf32>
    %22 = arith.subf %19, %21 : vector<8x128xf32>
    %23 = arith.select %11, %22, %0 : vector<8x128xi1>, vector<8x128xf32>
    %cst_6 = arith.constant 6.400000e+01 : f32
    %24 = vector.broadcast %cst_6 : f32 to vector<8x128xf32>
    %25 = arith.mulf %23, %24 : vector<8x128xf32>
    %c0_7 = arith.constant 0 : index
    %c0_8 = arith.constant 0 : index
    %26 = vector.load %arg4[%c0_7, %c0_8] : memref<8x128xf32, #tpu.memory_space<vmem>>, vector<8x128xf32>
    tpu.vector_store %arg4[%c0_7, %c0_8], %25 {strides = array<i32>} : memref<8x128xf32, #tpu.memory_space<vmem>>, vector<8x128xf32>,
    return
  }
  func.func @transform_0(%arg0: i32, %arg1: i32) -> (i32, i32) {
    %c0_i32 = arith.constant 0 : i32
    %c0_i32_0 = arith.constant 0 : i32
    return %arg0, %c0_i32 : i32, i32
  }
  func.func @transform_1(%arg0: i32, %arg1: i32) -> (i32, i32) {
    %c0_i32 = arith.constant 0 : i32
    return %arg0, %arg1 : i32, i32
  }
  func.func @transform_2(%arg0: i32, %arg1: i32) -> (i32, i32) {
    %c0_i32 = arith.constant 0 : i32
    return %arg0, %arg1 : i32, i32
  }
}

</mosaic_0001>

<llo_original>
// kernel: tpu_custom_call.1
$region0: #{tpu_custom_call.1}
  #allocation0 [shape = 'u32[]', space=smem, size = 0x4, offset = 0x4, fixed_abs, tag = 'smem constant byte address 0x4 - core index']
  #allocation1 [shape = 'u32[144,128]{1,0:T(1,128)}', space=vmem, size = 0x12000, scoped, tag = 'internal scratch']
  %s0 = inlined_call_operand.vmem [shape: s32[16,1], index: 0, kind: input, shape index: {}]
  %s1 = inlined_call_operand.hbm [shape: f32[16,384], index: 1, kind: input, shape index: {}]
  %s2 = inlined_call_operand.hbm [shape: f32[16,384], index: 2, kind: output, shape index: {}]
  %s3 = sld [smem:[#allocation0]]
  $region45: #{tpu_custom_call.1} parent=0
    _
  %s5 = ssub.s32 1, %s3
  %s6 = scalar_select 0, %s5, %s3
  $region1: #{tpu_custom_call.1} parent=0
    #allocation2 [shape = 'u8[8192]{0}', space=vmem, size = 0x2000, scoped, tag = 'input window, operand 1']
    #allocation3 [shape = 's32[2]{0}', space=sflag, size = 0x8, scoped, tag = 'scoped memory for tpu_custom_call.1']
    #allocation4 [shape = 's32[2]{0}', space=sflag, size = 0x8, scoped, tag = 'scoped memory for tpu_custom_call.1']
    #allocation5 [shape = 'u8[8192]{0}', space=vmem, size = 0x2000, scoped, tag = 'output window, operand 0']
    %7 = vsyncpa [#allocation3], 0
    %s8 = scalar_lea.sflag [#allocation3], 1
    %9 = vsyncpa %s8, 0
    %10 = vsyncpa [#allocation4], 0
    %s11 = scalar_lea.sflag [#allocation4], 1
    %12 = vsyncpa %s11, 0
    loop: start=0, step=1, limit=8
    $region2: #{tpu_custom_call.1} parent=1 // loop_pre_header
      _
    $region3: #{tpu_custom_call.1} parent=1 // loop_header
      %s14 = sphi 0, %s18
      %p15 = scmp.ge.s32.totalorder %s14, 8
      %s21 = sphi 0, %s33
      %s22 = sphi 0, %s29
      %s23 = sphi 0, %s21
      %s24 = sphi 0, %s22
      %s25 = sphi 0, %s23
      %s26 = sphi 0, %s24
      %s36 = sphi 0, %s38
      %s39 = sphi 0, %s36
      %s40 = sphi 0, %s39
      %s56 = sphi 0, %s40
      %s64 = sphi 0, %s66
      %s67 = sphi 0, %s64
      %s68 = sphi 0, %s67
      %s84 = sphi 0, %s68
      %s92 = sphi 0, %s94
      %s95 = sphi 0, %s92
      %s96 = sphi 0, %s95
      %s112 = sphi 0, %s96
    $region4: #{tpu_custom_call.1} parent=1 // loop_header_branch
      %17 = sbr.rel (%p15) target = $region8
    $region5: #{tpu_custom_call.1} parent=1 // loop_body
      %s19 = ssub.s32 %s14, 1
      %s20 = ssub.s32 %s14, 2
      %s27 = sadd.s32 1, %s22
      %p28 = scmp.ge.s32.totalorder %s27, 3
      %s29 = scalar_select %p28, 0, %s27
      %s30 = sadd.s32 1, %s21
      %s31 = scalar_select %p28, %s30, %s21
      %p32 = scmp.ge.s32.totalorder %s31, 2
      %s33 = scalar_select %p32, 0, %s31
      %s34 = ssub.s32 %s21, %s33
      %p35 = scmp.eq.s32.totalorder %s34, 0
      %s37 = sadd.s32 %s36, 1
      %s38 = scalar_select %p35, %s36, %s37
      %p41 = pneg %p35
      %p42 = scmp.eq.s32.totalorder %s14, 5
      %p43 = por %p41, %p42
      %p44 = scmp.ne.s32.totalorder %s36, %s39
      %p45 = scmp.eq.s32.totalorder %s14, 0
      %p46 = por %p44, %p45
      %p47 = scmp.ne.s32.totalorder %s36, %s39
      %p48 = scmp.eq.s32.totalorder %s19, 5
      %p49 = por %p47, %p48
      %p50 = scmp.ne.s32.totalorder %s39, %s40
      %p51 = scmp.eq.s32.totalorder %s19, 0
      %p52 = por %p50, %p51
      %p53 = scmp.ne.s32.totalorder %s39, %s40
      %p54 = scmp.eq.s32.totalorder %s20, 5
      %p55 = por %p53, %p54
      %p57 = scmp.ne.s32.totalorder %s40, %s56
      %p58 = scmp.eq.s32.totalorder %s20, 0
      %p59 = por %p57, %p58
      %s60 = ssub.s32 %s21, %s33
      %s61 = ssub.s32 %s22, %s29
      %s62 = sor.u32 %s60, %s61
      %p63 = scmp.eq.s32.totalorder %s62, 0
      %s65 = sadd.s32 %s64, 1
      %s66 = scalar_select %p63, %s64, %s65
      %p69 = pneg %p63
      %p70 = scmp.eq.s32.totalorder %s14, 5
      %p71 = por %p69, %p70
      %p72 = scmp.ne.s32.totalorder %s64, %s67
      %p73 = scmp.eq.s32.totalorder %s14, 0
      %p74 = por %p72, %p73
      %p75 = scmp.ne.s32.totalorder %s64, %s67
      %p76 = scmp.eq.s32.totalorder %s19, 5
      %p77 = por %p75, %p76
      %p78 = scmp.ne.s32.totalorder %s67, %s68
      %p79 = scmp.eq.s32.totalorder %s19, 0
      %p80 = por %p78, %p79
      %p81 = scmp.ne.s32.totalorder %s67, %s68
      %p82 = scmp.eq.s32.totalorder %s20, 5
      %p83 = por %p81, %p82
      %p85 = scmp.ne.s32.totalorder %s68, %s84
      %p86 = scmp.eq.s32.totalorder %s20, 0
      %p87 = por %p85, %p86
      %s88 = ssub.s32 %s21, %s33
      %s89 = ssub.s32 %s22, %s29
      %s90 = sor.u32 %s88, %s89
      %p91 = scmp.eq.s32.totalorder %s90, 0
      %s93 = sadd.s32 %s92, 1
      %s94 = scalar_select %p91, %s92, %s93
      %p97 = pneg %p91
      %p98 = scmp.eq.s32.totalorder %s14, 5
      %p99 = por %p97, %p98
      %p100 = scmp.ne.s32.totalorder %s92, %s95
      %p101 = scmp.eq.s32.totalorder %s14, 0
      %p102 = por %p100, %p101
      %p103 = scmp.ne.s32.totalorder %s92, %s95
      %p104 = scmp.eq.s32.totalorder %s19, 5
      %p105 = por %p103, %p104
      %p106 = scmp.ne.s32.totalorder %s95, %s96
      %p107 = scmp.eq.s32.totalorder %s19, 0
      %p108 = por %p106, %p107
      %p109 = scmp.ne.s32.totalorder %s95, %s96
      %p110 = scmp.eq.s32.totalorder %s20, 5
      %p111 = por %p109, %p110
      %p113 = scmp.ne.s32.totalorder %s96, %s112
      %p114 = scmp.eq.s32.totalorder %s20, 0
      %p115 = por %p113, %p114
      %p116 = scmp.le.s32.totalorder 1, %s14
      %p117 = scmp.lt.s32.totalorder %s14, 7
      %p118 = pnand %p116, %p117
      %p119 = pneg %p118
      // Predicated region
      $region9: #{tpu_custom_call.1} parent=5 // pred_check
        _
      $region10: #{tpu_custom_call.1} parent=5 // pred_check_branch
        %121 = sbr.rel (%p118) target = $region12
      $region11: #{tpu_custom_call.1} parent=5 // pred_region
        %s122 = ssub.s32 %s14, 1
      $region12: #{tpu_custom_call.1} parent=5 // pred_fallthru
        _
      %p123 = scmp.lt.s32.totalorder %s14, 6
      // Predicated region
      $region13: #{tpu_custom_call.1} parent=5 // pred_check
        %p124 = pneg %p123
      $region14: #{tpu_custom_call.1} parent=5 // pred_check_branch
        %126 = sbr.rel (%p124) target = $region16
      $region15: #{tpu_custom_call.1} parent=5 // pred_region
        // Predicated region
        $region17: #{tpu_custom_call.1} parent=15 // pred_check
          %p127 = pneg %p46
        $region18: #{tpu_custom_call.1} parent=15 // pred_check_branch
          %129 = sbr.rel (%p127) target = $region20
        $region19: #{tpu_custom_call.1} parent=15 // pred_region
          %p130 = scmp.lt.s32.totalorder %s21, 1
          %s131 = scalar_select %p130, %s21, 1
          %s132 = smul.addr %s131, 8
          %s133 = scalar_lea.vmem %s0, %s132
        $region20: #{tpu_custom_call.1} parent=15 // pred_fallthru
          _
        // Predicated region
        $region21: #{tpu_custom_call.1} parent=15 // pred_check
          %p134 = pneg %p74
        $region22: #{tpu_custom_call.1} parent=15 // pred_check_branch
          %136 = sbr.rel (%p134) target = $region24
        $region23: #{tpu_custom_call.1} parent=15 // pred_region
          %s137 = sand.u32 %s64, 1
          %s138 = scalar_lea.sflag [#allocation3], %s137
          %s139 = sand.u32 %s64, 1
          %s140 = smul.addr %s139, 8
          %s141 = scalar_lea.vmem [#allocation2], %s140
          %s143 = ssub.s32 128, 128
          %144 = vsyncadd %s138, %s143
          %s145 = smul.addr %s21, 3
          %s146 = sadd.s32 %s22, %s145
          %s147 = smul.addr %s146, 128
          %s148 = scalar_lea.hbm %s1, %s147
          %s150 = sshll.u32 %s141, 4
          %s151 = int_to_ptr.vmem [resolvable:$true] %s150
          %153 = dma.hbm_to_vmem [thread:$0]  %s148, 128, %s151, %s138
        $region24: #{tpu_custom_call.1} parent=15 // pred_fallthru
          _
      $region16: #{tpu_custom_call.1} parent=5 // pred_fallthru
        _
      %p154 = scmp.le.s32.totalorder 1, %s14
      %p155 = scmp.lt.s32.totalorder %s14, 7
      %p156 = pnand %p154, %p155
      %p157 = pneg %p156
      // Predicated region
      $region25: #{tpu_custom_call.1} parent=5 // pred_check
        _
      $region26: #{tpu_custom_call.1} parent=5 // pred_check_branch
        %159 = sbr.rel (%p156) target = $region28
      $region27: #{tpu_custom_call.1} parent=5 // pred_region
        %s160 = ssub.s32 %s14, 1
        %s161 = sand.u32 %s67, 1
        %s162 = scalar_lea.sflag [#allocation3], %s161
        %s163 = sand.u32 %s67, 1
        %s164 = smul.addr %s163, 8
        %s165 = scalar_lea.vmem [#allocation2], %s164
        // Predicated region
        $region29: #{tpu_custom_call.1} parent=27 // pred_check
          %p166 = pneg %p80
        $region30: #{tpu_custom_call.1} parent=27 // pred_check_branch
          %168 = sbr.rel (%p166) target = $region32
        $region31: #{tpu_custom_call.1} parent=27 // pred_region
          %169 = dma.done %s162, 128
        $region32: #{tpu_custom_call.1} parent=27 // pred_fallthru
          _
        %p170 = scmp.lt.s32.totalorder %s23, 1
        %s171 = scalar_select %p170, %s23, 1
        %s172 = smul.addr %s171, 8
        %s173 = scalar_lea.vmem %s0, %s172
        %p174 = pneg %p52
        %p175 = pneg %p49
        %s176 = sand.u32 %s67, 1
        %s177 = scalar_lea.sflag [#allocation3], %s176
        %s178 = sand.u32 %s67, 1
        %s179 = smul.addr %s178, 8
        %s180 = scalar_lea.vmem [#allocation2], %s179
        %p181 = pneg %p80
        %p182 = pneg %p77
        %p183 = pneg %p108
        %p184 = pneg %p105
        %s185 = sand.u32 %s95, 1
        %s186 = scalar_lea.sflag [#allocation4], %s185
        %s187 = sand.u32 %s95, 1
        %s188 = smul.addr %s187, 8
        %s189 = scalar_lea.vmem [#allocation5], %s188
        %p190 = scmp.lt.s32.totalorder %s23, 1
        %s191 = scalar_select %p190, %s23, 1
        %s192 = smul.addr %s191, 8
        %s193 = scalar_lea.vmem %s0, %s192
        %v194 = vld [vmem:[%s165] sm:$0xff]
        %v195 = vld [vmem:[%s193] sm:$0xff]
        %v196 = vlaneseq
        %v197 = vand.u32 %v196, 127
        %s198 = smul.u32 %s24, 128
        %v199 = vstv %s198
        %v200 = vadd.s32 %v197, %v199
        %vm201 = vcmp.ne.s32.totalorder %v195, 4294967295
        %202 = vset.pattern.permute.xlu0 0
        %203 = vperm.xlu0 %202, %v195
        %v204 = vpop.permute.xlu0 %203
        %vm205 = vcmp.eq.s32.totalorder %v200, %v204
        %v206 = vsel %vm201, 1, 0
        %207 = vset.pattern.permute.xlu0 0
        %208 = vperm.xlu0 %207, %v206
        %v209 = vpop.permute.xlu0 %208
        %vm210 = vcmp.eq.s32.totalorder %v209, 1
        %vm211 = vmand %vm210, %vm205
        %v212 = vmul.f32 %v194, %v194
        %v213 = vsub.f32 1.0, %v212
        %v214 = vmax.f32 %v213, 0.0
        %v215 = vrsqrt.pop %v214
        %v216 = vmul.f32 %v214, %v215
        %vm217 = vcmp.eq.f32.partialorder %v214, inf
        %v218 = vsel %vm217, %v214, %v216
        %vm219 = vcmp.eq.f32.partialorder %v214, 0.0
        %v220 = vand.u32 %v214, 2147483648
        %v221 = vsel %vm219, %v220, %v218
        %v222 = vmul.f32 %v194, 0.87758255
        %v223 = vmul.f32 %v221, 0.47942555
        %v224 = vsub.f32 %v222, %v223
        %v225 = vsel %vm211, %v224, %v194
        %v226 = vmul.f32 %v225, 64.0
        %227 = vst [vmem:[%s189] sm:$0xff] %v226
        %s228 = sand.u32 %s95, 1
        %s229 = scalar_lea.sflag [#allocation4], %s228
        %s230 = sand.u32 %s95, 1
        %s231 = smul.addr %s230, 8
        %s232 = scalar_lea.vmem [#allocation5], %s231
        // Predicated region
        $region33: #{tpu_custom_call.1} parent=27 // pred_check
          %p233 = pneg %p105
        $region34: #{tpu_custom_call.1} parent=27 // pred_check_branch
          %235 = sbr.rel (%p233) target = $region36
        $region35: #{tpu_custom_call.1} parent=27 // pred_region
          %s237 = ssub.s32 128, 128
          %238 = vsyncadd %s229, %s237
          %s239 = smul.addr %s23, 3
          %s240 = sadd.s32 %s24, %s239
          %s241 = smul.addr %s240, 128
          %s242 = scalar_lea.hbm %s2, %s241
          %s244 = sshll.u32 %s232, 4
          %s245 = int_to_ptr.vmem [resolvable:$true] %s244
          %247 = dma.vmem_to_hbm [thread:$0]  %s245, 128, %s242, %s229
        $region36: #{tpu_custom_call.1} parent=27 // pred_fallthru
          _
      $region28: #{tpu_custom_call.1} parent=5 // pred_fallthru
        _
      %p248 = scmp.le.s32.totalorder 2, %s14
      // Predicated region
      $region37: #{tpu_custom_call.1} parent=5 // pred_check
        %p249 = pneg %p248
      $region38: #{tpu_custom_call.1} parent=5 // pred_check_branch
        %251 = sbr.rel (%p249) target = $region40
      $region39: #{tpu_custom_call.1} parent=5 // pred_region
        %s252 = ssub.s32 %s14, 2
        // Predicated region
        $region41: #{tpu_custom_call.1} parent=39 // pred_check
          %p253 = pneg %p111
        $region42: #{tpu_custom_call.1} parent=39 // pred_check_branch
          %255 = sbr.rel (%p253) target = $region44
        $region43: #{tpu_custom_call.1} parent=39 // pred_region
          %s256 = sand.u32 %s96, 1
          %s257 = scalar_lea.sflag [#allocation4], %s256
          %s258 = sand.u32 %s96, 1
          %s259 = smul.addr %s258, 8
          %s260 = scalar_lea.vmem [#allocation5], %s259
          %261 = dma.done %s257, 128
        $region44: #{tpu_custom_call.1} parent=39 // pred_fallthru
          _
      $region40: #{tpu_custom_call.1} parent=5 // pred_fallthru
        _
    $region6: #{tpu_custom_call.1} parent=1 // loop_footer
      %s18 = sadd.s32 1, %s14
    $region7: #{tpu_custom_call.1} parent=1 // loop_footer_branch
      %13 = sbr.rel target = $region3
    $region8: #{tpu_custom_call.1} parent=1 // loop_exit
      _
    %262 = vsyncpa [#allocation3], 1
    %s263 = scalar_lea.sflag [#allocation3], 1
    %264 = vsyncpa %s263, 1
    %265 = vsyncpa [#allocation4], 1
    %s266 = scalar_lea.sflag [#allocation4], 1
    %267 = vsyncpa %s266, 1

</llo_original>
